<compile_context>
chip_gen: v5e
topology: v5e:2x2
jax: 0.10.0
libtpu: 0.0.40
codegen_flags: <defaults>
</compile_context>

<pallas_src>
import functools

import jax
import jax.numpy as jnp
from jax.experimental import pallas as pl
from jax.experimental.pallas import tpu as pltpu

_OUT_PAD = 8  # pad out_len (5 or 6) up to a full sublane tile


def _output_model_kernel(x_ref, w1_ref, b1_ref, w2_ref, b2_ref, w3t_ref, b3_ref,
                         o_ref, *, min_stdev, compute_dtype):
    """One row-tile of the 3-layer MLP + per-row distribution transforms.

    x_ref:   (tile_n, d_k)        activations (compute_dtype)
    w1,w2:   (d_k, d_k)           (in, out) layout (compute_dtype)
    w3t:     (_OUT_PAD, d_k)      transposed (torch Linear) layout, zero-padded
    b1,b2:   (1, d_k) float32     b3: (_OUT_PAD, 1) float32
    o_ref:   (_OUT_PAD, tile_n)   float32, lane-dense transposed output block
    """
    x = x_ref[...]                                                   # (tn, d_k)

    h1 = jnp.dot(x, w1_ref[...], preferred_element_type=jnp.float32) + b1_ref[...]
    h1 = jnp.maximum(h1, 0.0)                                        # ReLU

    h2 = jnp.dot(h1.astype(compute_dtype), w2_ref[...],
                 preferred_element_type=jnp.float32) + b2_ref[...]
    h2 = jnp.maximum(h2, 0.0)                                        # ReLU

    # Final projection directly in transposed layout:
    #   o_t[o, n] = sum_k w3t[o, k] * h2[n, k]   -> (_OUT_PAD, tile_n)
    o_t = jax.lax.dot_general(
        w3t_ref[...], h2.astype(compute_dtype),
        dimension_numbers=(((1,), (1,)), ((), ())),
        preferred_element_type=jnp.float32) + b3_ref[...]

    # Rows: 0,1 = means (identity); 2,3 = softplus + min_stdev; 4 = tanh*0.9;
    # 5 = yaw (identity, if present); 5..7 padding (identity, sliced off).
    row = jax.lax.broadcasted_iota(jnp.int32, o_t.shape, 0)
    sigma = jax.nn.softplus(o_t) + min_stdev
    rho = jnp.tanh(o_t) * 0.9
    out = jnp.where(row < 2, o_t,
                    jnp.where(row < 4, sigma,
                              jnp.where(row == 4, rho, o_t)))
    o_ref[...] = out.astype(o_ref.dtype)


def _choose_grid(n_rows, *, num_steps=None, max_rows_per_step=16384):
    """Default: one grid step (block == full array, zero pipeline overhead).

    If num_steps is given (e.g. 2 on v7x so both TensorCores get equal work
    on the 'parallel' axis), or n_rows is very large, split into 128-aligned
    row tiles; the split count is rounded up to an even number so a v7x
    megacore split is balanced."""
    if num_steps is None:
        num_steps = pl.cdiv(n_rows, max_rows_per_step)
        if num_steps > 1 and num_steps % 2:
            num_steps += 1
    if num_steps <= 1:
        return 1, n_rows
    tile_n = max(128, pl.cdiv(pl.cdiv(n_rows, num_steps), 128) * 128)
    return pl.cdiv(n_rows, tile_n), tile_n


def output_model_forward(agent_latent_state, params, *, min_stdev=0.01,
                         num_steps=None, compute_dtype=jnp.bfloat16):
    """Pallas implementation of OutputModel.forward.

    agent_latent_state: (T, BK, d_k)
    params: dict with w1 (d_k,d_k), b1 (1,d_k), w2 (d_k,d_k), b2 (1,d_k),
            w3t (out_len,d_k), b3 (out_len,1)
    num_steps: None (auto; 1 step for small N) or an explicit grid-step count
            (pass 2 when targeting v7x to split evenly across both TCs).
    compute_dtype: jnp.bfloat16 (default, MXU fast path on all generations,
            f32 accumulation) or jnp.float32 (tight validation).
    """
    T, BK, d_k = agent_latent_state.shape
    out_len = params["w3t"].shape[0]
    n = T * BK
    x = agent_latent_state.reshape(n, d_k)

    n_steps, tile_n = _choose_grid(n, num_steps=num_steps)

    # Pad the (tiny) final-layer params up to 8 output rows -> fully aligned
    # (8,128) stores and tile-aligned MXU pop; padded rows are zeros.
    w1, w2 = params["w1"], params["w2"]
    w3t, b3 = params["w3t"], params["b3"]
    if out_len < _OUT_PAD:
        w3t = jnp.pad(w3t, ((0, _OUT_PAD - out_len), (0, 0)))
        b3 = jnp.pad(b3, ((0, _OUT_PAD - out_len), (0, 0)))

    if compute_dtype != jnp.float32:
        x = x.astype(compute_dtype)
        w1 = w1.astype(compute_dtype)
        w2 = w2.astype(compute_dtype)
        w3t = w3t.astype(compute_dtype)

    kernel = functools.partial(_output_model_kernel, min_stdev=min_stdev,
                               compute_dtype=compute_dtype)

    itemsize = jnp.dtype(compute_dtype).itemsize
    flops = 2 * n * d_k * (2 * d_k + _OUT_PAD)
    bytes_accessed = (n * d_k * itemsize                    # activations in
                      + n * _OUT_PAD * 4                    # output (f32)
                      + (2 * d_k * d_k + _OUT_PAD * d_k) * itemsize  # weights
                      + (2 * d_k + _OUT_PAD) * 4)           # biases (f32)
    cost = pl.CostEstimate(flops=flops,
                           transcendentals=3 * n,           # 2x softplus + tanh
                           bytes_accessed=bytes_accessed)

    # VMEM footprint (double-buffered streamed operands + resident weights).
    vmem_bytes = (2 * tile_n * d_k * itemsize               # x tile
                  + 2 * _OUT_PAD * tile_n * 4               # out tile
                  + 2 * (2 * d_k * d_k + _OUT_PAD * d_k) * itemsize
                  + 2 * (2 * d_k + _OUT_PAD) * 4)
    cp_kwargs = dict(dimension_semantics=("parallel",))
    if vmem_bytes > 12 * (1 << 20):
        # Only needed when a single big tile approaches the scoped default.
        cp_kwargs["vmem_limit_bytes"] = min(int(2 * vmem_bytes), 96 * (1 << 20))

    # NOTE: when n_steps > 1 and tile_n does not divide n, the ragged last
    # block reads garbage rows past the array; they never mix with valid rows
    # (no cross-row reductions) and their output columns are sliced off below.
    out_t = pl.pallas_call(
        kernel,
        out_shape=jax.ShapeDtypeStruct((_OUT_PAD, n), jnp.float32),
        grid_spec=pltpu.PrefetchScalarGridSpec(
            num_scalar_prefetch=0,
            grid=(n_steps,),
            in_specs=[
                pl.BlockSpec((tile_n, d_k), lambda i: (i, 0)),        # x tile
                pl.BlockSpec((d_k, d_k), lambda i: (0, 0)),           # w1 (resident)
                pl.BlockSpec((1, d_k), lambda i: (0, 0)),             # b1
                pl.BlockSpec((d_k, d_k), lambda i: (0, 0)),           # w2 (resident)
                pl.BlockSpec((1, d_k), lambda i: (0, 0)),             # b2
                pl.BlockSpec((_OUT_PAD, d_k), lambda i: (0, 0)),      # w3t (resident)
                pl.BlockSpec((_OUT_PAD, 1), lambda i: (0, 0)),        # b3
            ],
            out_specs=pl.BlockSpec((_OUT_PAD, tile_n), lambda i: (0, i)),
        ),
        compiler_params=pltpu.CompilerParams(**cp_kwargs),
        cost_estimate=cost,
    )(x, w1, params["b1"], w2, params["b2"], w3t, b3)

    # (8, n) -> (T, BK, out_len): drop padded rows, transpose back (layout
    # plumbing only).
    return out_t[:out_len, :].T.reshape(T, BK, out_len)


def init_params(key, d_k=64, predict_yaw=False):
    """Deterministic xavier_normal_(gain=sqrt(2)) weights, zero biases.

    w1/w2 stored as (in, out); w3 stored transposed (out_len, d_k) == torch layout.
    """
    out_len = 6 if predict_yaw else 5
    gain = jnp.sqrt(2.0)

    def xavier_normal(k, shape, fan_in, fan_out):
        std = gain * jnp.sqrt(2.0 / (fan_in + fan_out))
        return std * jax.random.normal(k, shape, dtype=jnp.float32)

    k1, k2, k3 = jax.random.split(key, 3)
    return {
        "w1": xavier_normal(k1, (d_k, d_k), d_k, d_k),
        "b1": jnp.zeros((1, d_k), jnp.float32),
        "w2": xavier_normal(k2, (d_k, d_k), d_k, d_k),
        "b2": jnp.zeros((1, d_k), jnp.float32),
        "w3t": xavier_normal(k3, (out_len, d_k), d_k, out_len),
        "b3": jnp.zeros((out_len, 1), jnp.float32),
    }


def _reference_forward(x, params, min_stdev=0.01):
    """Pure-JAX reference of OutputModel.forward for validation."""
    T, BK, d_k = x.shape
    h = x.reshape(-1, d_k)
    h = jnp.maximum(h @ params["w1"] + params["b1"], 0.0)
    h = jnp.maximum(h @ params["w2"] + params["b2"], 0.0)
    o = (h @ params["w3t"].T + params["b3"].T).reshape(T, BK, -1)
    x_mean = o[:, :, 0]
    y_mean = o[:, :, 1]
    x_sigma = jax.nn.softplus(o[:, :, 2]) + min_stdev
    y_sigma = jax.nn.softplus(o[:, :, 3]) + min_stdev
    rho = jnp.tanh(o[:, :, 4]) * 0.9
    cols = [x_mean, y_mean, x_sigma, y_sigma, rho]
    if o.shape[-1] == 6:
        cols.append(o[:, :, 5])
    return jnp.stack(cols, axis=2)


if __name__ == "__main__":
    key = jax.random.PRNGKey(0)
    k_in, k_par, k_par_yaw = jax.random.split(key, 3)

    d_k = 64           # module default hidden size
    T, BK = 10, 33     # N = 330 rows (non-aligned; exercised without any padding)

    agent_latent_state = jax.random.normal(k_in, (T, BK, d_k), dtype=jnp.float32)

    params = init_params(k_par, d_k=d_k, predict_yaw=False)
    ref = _reference_forward(agent_latent_state, params)

    # --- default bf16 fast path, single-step grid ---
    out_bf16 = jax.block_until_ready(output_model_forward(agent_latent_state, params))
    assert out_bf16.shape == (T, BK, 5)
    assert bool(jnp.all(jnp.isfinite(out_bf16)))
    assert jnp.allclose(out_bf16, ref, atol=0.25, rtol=0.05)

    # --- f32 path (tight validation), single-step grid ---
    out_f32 = jax.block_until_ready(
        output_model_forward(agent_latent_state, params, compute_dtype=jnp.float32))
    assert out_f32.shape == (T, BK, 5)
    assert jnp.allclose(out_f32, ref, atol=1e-4, rtol=1e-4)

    # --- f32 path, predict_yaw=True (out_len=6) ---
    params_yaw = init_params(k_par_yaw, d_k=d_k, predict_yaw=True)
    out_yaw = jax.block_until_ready(
        output_model_forward(agent_latent_state, params_yaw, compute_dtype=jnp.float32))
    ref_yaw = _reference_forward(agent_latent_state, params_yaw)
    assert out_yaw.shape == (T, BK, 6)
    assert jnp.allclose(out_yaw, ref_yaw, atol=1e-4, rtol=1e-4)

    # --- v7x-style even 2-step split (exercises the ragged last block path) ---
    out_2 = jax.block_until_ready(
        output_model_forward(agent_latent_state, params, compute_dtype=jnp.float32,
                             num_steps=2))
    assert out_2.shape == (T, BK, 5)
    assert jnp.allclose(out_2, ref, atol=1e-4, rtol=1e-4)

    print("KERNEL_OK")
</pallas_src>

<mosaic_0001>
module attributes {stable_mosaic.version = 11 : i64} {
  func.func @_output_model_kernel(%arg0: i32, %arg1: memref<330x64xbf16, #tpu.memory_space<vmem>>, %arg2: memref<64x64xbf16, #tpu.memory_space<vmem>>, %arg3: memref<1x64xf32, #tpu.memory_space<vmem>>, %arg4: memref<64x64xbf16, #tpu.memory_space<vmem>>, %arg5: memref<1x64xf32, #tpu.memory_space<vmem>>, %arg6: memref<8x64xbf16, #tpu.memory_space<vmem>>, %arg7: memref<8x1xf32, #tpu.memory_space<vmem>>, %arg8: memref<8x330xf32, #tpu.memory_space<vmem>>) attributes {dimension_semantics = [#tpu.dimension_semantics<parallel>], iteration_bounds = array<i64: 1>, scalar_prefetch = 0 : i64, scratch_operands = 0 : i64, tpu.core_type = #tpu.core_type<tc>, window_params = [{transform_indices = @transform_0, window_bounds = array<i64: 330, 64>}, {pipeline_mode = #tpu.pipeline_mode<synchronous>, transform_indices = @transform_1, window_bounds = array<i64: 64, 64>}, {pipeline_mode = #tpu.pipeline_mode<synchronous>, transform_indices = @transform_2, window_bounds = array<i64: 1, 64>}, {pipeline_mode = #tpu.pipeline_mode<synchronous>, transform_indices = @transform_3, window_bounds = array<i64: 64, 64>}, {pipeline_mode = #tpu.pipeline_mode<synchronous>, transform_indices = @transform_4, window_bounds = array<i64: 1, 64>}, {pipeline_mode = #tpu.pipeline_mode<synchronous>, transform_indices = @transform_5, window_bounds = array<i64: 8, 64>}, {pipeline_mode = #tpu.pipeline_mode<synchronous>, transform_indices = @transform_6, window_bounds = array<i64: 8, 1>}, {transform_indices = @transform_7, window_bounds = array<i64: 8, 330>}]} {
    %c0 = arith.constant 0 : index
    %c0_0 = arith.constant 0 : index
    %0 = vector.load %arg1[%c0, %c0_0] : memref<330x64xbf16, #tpu.memory_space<vmem>>, vector<330x64xbf16>
    %c0_1 = arith.constant 0 : index
    %c0_2 = arith.constant 0 : index
    %1 = vector.load %arg2[%c0_1, %c0_2] : memref<64x64xbf16, #tpu.memory_space<vmem>>, vector<64x64xbf16>
    %cst = arith.constant dense<0.000000e+00> : vector<330x64xf32>
    %2 = tpu.matmul %0, %1, %cst {dimension_numbers = #tpu.dot_dimension_numbers<[1], [0], [0], [1], [0, 0, 1, 1], [], []>} : vector<330x64xbf16>, vector<64x64xbf16>, vector<330x64xf32> -> vector<330x64xf32>
    %c0_3 = arith.constant 0 : index
    %c0_4 = arith.constant 0 : index
    %3 = vector.load %arg3[%c0_3, %c0_4] : memref<1x64xf32, #tpu.memory_space<vmem>>, vector<1x64xf32>
    %4 = vector.broadcast %3 : vector<1x64xf32> to vector<330x64xf32>
    %5 = arith.addf %2, %4 : vector<330x64xf32>
    %cst_5 = arith.constant 0.000000e+00 : f32
    %6 = vector.broadcast %cst_5 : f32 to vector<330x64xf32>
    %7 = arith.maximumf %5, %6 : vector<330x64xf32>
    %8 = arith.truncf %7 : vector<330x64xf32> to vector<330x64xbf16>
    %c0_6 = arith.constant 0 : index
    %c0_7 = arith.constant 0 : index
    %9 = vector.load %arg4[%c0_6, %c0_7] : memref<64x64xbf16, #tpu.memory_space<vmem>>, vector<64x64xbf16>
    %cst_8 = arith.constant dense<0.000000e+00> : vector<330x64xf32>
    %10 = tpu.matmul %8, %9, %cst_8 {dimension_numbers = #tpu.dot_dimension_numbers<[1], [0], [0], [1], [0, 0, 1, 1], [], []>} : vector<330x64xbf16>, vector<64x64xbf16>, vector<330x64xf32> -> vector<330x64xf32>
    %c0_9 = arith.constant 0 : index
    %c0_10 = arith.constant 0 : index
    %11 = vector.load %arg5[%c0_9, %c0_10] : memref<1x64xf32, #tpu.memory_space<vmem>>, vector<1x64xf32>
    %12 = vector.broadcast %11 : vector<1x64xf32> to vector<330x64xf32>
    %13 = arith.addf %10, %12 : vector<330x64xf32>
    %cst_11 = arith.constant 0.000000e+00 : f32
    %14 = vector.broadcast %cst_11 : f32 to vector<330x64xf32>
    %15 = arith.maximumf %13, %14 : vector<330x64xf32>
    %c0_12 = arith.constant 0 : index
    %c0_13 = arith.constant 0 : index
    %16 = vector.load %arg6[%c0_12, %c0_13] : memref<8x64xbf16, #tpu.memory_space<vmem>>, vector<8x64xbf16>
    %17 = arith.truncf %15 : vector<330x64xf32> to vector<330x64xbf16>
    %cst_14 = arith.constant dense<0.000000e+00> : vector<8x330xf32>
    %18 = tpu.matmul %16, %17, %cst_14 {dimension_numbers = #tpu.dot_dimension_numbers<[1], [1], [0], [0], [0, 0, 1, 0], [], []>} : vector<8x64xbf16>, vector<330x64xbf16>, vector<8x330xf32> -> vector<8x330xf32>
    %c0_15 = arith.constant 0 : index
    %c0_16 = arith.constant 0 : index
    %19 = vector.load %arg7[%c0_15, %c0_16] : memref<8x1xf32, #tpu.memory_space<vmem>>, vector<8x1xf32>
    %20 = vector.broadcast %19 : vector<8x1xf32> to vector<8x330xf32>
    %21 = arith.addf %18, %20 : vector<8x330xf32>
    %22 = tpu.iota {dimensions = array<i32: 0>} : vector<8x330xi32>
    %cst_17 = arith.constant 0.000000e+00 : f32
    %23 = vector.broadcast %cst_17 : f32 to vector<8x330xf32>
    %24 = arith.maximumf %21, %23 : vector<8x330xf32>
    %25 = vector.broadcast %cst_17 : f32 to vector<8x330xf32>
    %26 = arith.subf %21, %25 : vector<8x330xf32>
    %27 = arith.cmpf one, %26, %26 : vector<8x330xf32>
    %28 = vector.broadcast %cst_17 : f32 to vector<8x330xf32>
    %29 = arith.addf %21, %28 : vector<8x330xf32>
    %30 = math.absf %26 : vector<8x330xf32>
    %cst_18 = arith.constant 0.000000e+00 : f32
    %31 = vector.broadcast %cst_18 : f32 to vector<8x330xf32>
    %32 = arith.subf %31, %30 : vector<8x330xf32>
    %33 = math.exp %32 : vector<8x330xf32>
    %34 = math.log1p %33 : vector<8x330xf32>
    %35 = arith.addf %24, %34 : vector<8x330xf32>
    %36 = arith.select %27, %29, %35 : vector<8x330xi1>, vector<8x330xf32>
    %cst_19 = arith.constant 0.00999999977 : f32
    %37 = vector.broadcast %cst_19 : f32 to vector<8x330xf32>
    %38 = arith.addf %36, %37 : vector<8x330xf32>
    %39 = math.tanh %21 : vector<8x330xf32>
    %cst_20 = arith.constant 0.899999976 : f32
    %40 = vector.broadcast %cst_20 : f32 to vector<8x330xf32>
    %41 = arith.mulf %39, %40 : vector<8x330xf32>
    %c2_i32 = arith.constant 2 : i32
    %42 = vector.broadcast %c2_i32 : i32 to vector<8x330xi32>
    %43 = arith.cmpi slt, %22, %42 : vector<8x330xi32>
    %c4_i32 = arith.constant 4 : i32
    %44 = vector.broadcast %c4_i32 : i32 to vector<8x330xi32>
    %45 = arith.cmpi slt, %22, %44 : vector<8x330xi32>
    %c4_i32_21 = arith.constant 4 : i32
    %46 = vector.broadcast %c4_i32_21 : i32 to vector<8x330xi32>
    %47 = arith.cmpi eq, %22, %46 : vector<8x330xi32>
    %48 = arith.select %47, %41, %21 : vector<8x330xi1>, vector<8x330xf32>
    %49 = arith.select %45, %38, %48 : vector<8x330xi1>, vector<8x330xf32>
    %50 = arith.select %43, %21, %49 : vector<8x330xi1>, vector<8x330xf32>
    %c0_22 = arith.constant 0 : index
    %c0_23 = arith.constant 0 : index
    %51 = vector.load %arg8[%c0_22, %c0_23] : memref<8x330xf32, #tpu.memory_space<vmem>>, vector<8x330xf32>
    tpu.vector_store %arg8[%c0_22, %c0_23], %50 {strides = array<i32>} : memref<8x330xf32, #tpu.memory_space<vmem>>, vector<8x330xf32>,
    return
  }
  func.func @transform_0(%arg0: i32) -> (i32, i32) {
    %c0_i32 = arith.constant 0 : i32
    %c0_i32_0 = arith.constant 0 : i32
    return %arg0, %c0_i32 : i32, i32
  }
  func.func @transform_1(%arg0: i32) -> (i32, i32) {
    %c0_i32 = arith.constant 0 : i32
    %c0_i32_0 = arith.constant 0 : i32
    %c0_i32_1 = arith.constant 0 : i32
    return %c0_i32, %c0_i32_0 : i32, i32
  }
  func.func @transform_2(%arg0: i32) -> (i32, i32) {
    %c0_i32 = arith.constant 0 : i32
    %c0_i32_0 = arith.constant 0 : i32
    %c0_i32_1 = arith.constant 0 : i32
    return %c0_i32, %c0_i32_0 : i32, i32
  }
  func.func @transform_3(%arg0: i32) -> (i32, i32) {
    %c0_i32 = arith.constant 0 : i32
    %c0_i32_0 = arith.constant 0 : i32
    %c0_i32_1 = arith.constant 0 : i32
    return %c0_i32, %c0_i32_0 : i32, i32
  }
  func.func @transform_4(%arg0: i32) -> (i32, i32) {
    %c0_i32 = arith.constant 0 : i32
    %c0_i32_0 = arith.constant 0 : i32
    %c0_i32_1 = arith.constant 0 : i32
    return %c0_i32, %c0_i32_0 : i32, i32
  }
  func.func @transform_5(%arg0: i32) -> (i32, i32) {
    %c0_i32 = arith.constant 0 : i32
    %c0_i32_0 = arith.constant 0 : i32
    %c0_i32_1 = arith.constant 0 : i32
    return %c0_i32, %c0_i32_0 : i32, i32
  }
  func.func @transform_6(%arg0: i32) -> (i32, i32) {
    %c0_i32 = arith.constant 0 : i32
    %c0_i32_0 = arith.constant 0 : i32
    %c0_i32_1 = arith.constant 0 : i32
    return %c0_i32, %c0_i32_0 : i32, i32
  }
  func.func @transform_7(%arg0: i32) -> (i32, i32) {
    %c0_i32 = arith.constant 0 : i32
    %c0_i32_0 = arith.constant 0 : i32
    return %c0_i32, %arg0 : i32, i32
  }
}

</mosaic_0001>

<llo_original>
// kernel: tpu_custom_call.1
$region0: #{tpu_custom_call.1}
  #allocation0 [shape = 'u32[]', space=smem, size = 0x4, offset = 0x4, fixed_abs, tag = 'smem constant byte address 0x4 - core index']
  #allocation1 [shape = 'u32[72,128]{1,0:T(1,128)}', space=vmem, size = 0x9000, scoped, tag = 'internal scratch']
  %s0 = inlined_call_operand.vmem [shape: bf16[330,64], index: 0, kind: input, shape index: {}]
  %s1 = inlined_call_operand.vmem [shape: bf16[64,64], index: 1, kind: input, shape index: {}]
  %s2 = inlined_call_operand.vmem [shape: f32[1,64], index: 2, kind: input, shape index: {}]
  %s3 = inlined_call_operand.vmem [shape: bf16[64,64], index: 3, kind: input, shape index: {}]
  %s4 = inlined_call_operand.vmem [shape: f32[1,64], index: 4, kind: input, shape index: {}]
  %s5 = inlined_call_operand.vmem [shape: bf16[8,64], index: 5, kind: input, shape index: {}]
  %s6 = inlined_call_operand.vmem [shape: f32[8,1], index: 6, kind: input, shape index: {}]
  %s7 = inlined_call_operand.hbm [shape: f32[8,330], index: 7, kind: output, shape index: {}]
  %s8 = sld [smem:[#allocation0]]
  $region38: #{tpu_custom_call.1} parent=0
    _
  %s10 = ssub.s32 1, %s8
  %s11 = scalar_select 0, %s10, %s8
  $region1: #{tpu_custom_call.1} parent=0
    #allocation2 [shape = 'u8[12288]{0}', space=vmem, size = 0x3000, scoped, tag = 'output window, operand 0, single buffered']
    #allocation3 [shape = 's32[1]{0}', space=sflag, size = 0x4, scoped, tag = 'scoped memory for tpu_custom_call.1']
    %12 = vsyncpa [#allocation3], 0
    // Predicated region
    $region2: #{tpu_custom_call.1} parent=1 // pred_check
      _
    $region3: #{tpu_custom_call.1} parent=1 // pred_check_branch
      %14 = sbr.rel (0) target = $region5
    $region4: #{tpu_custom_call.1} parent=1 // pred_region
      _
    $region5: #{tpu_custom_call.1} parent=1 // pred_fallthru
      _
    // Predicated region
    $region6: #{tpu_custom_call.1} parent=1 // pred_check
      _
    $region7: #{tpu_custom_call.1} parent=1 // pred_check_branch
      %16 = sbr.rel (0) target = $region9
    $region8: #{tpu_custom_call.1} parent=1 // pred_region
      _
    $region9: #{tpu_custom_call.1} parent=1 // pred_fallthru
      _
    // Predicated region
    $region10: #{tpu_custom_call.1} parent=1 // pred_check
      _
    $region11: #{tpu_custom_call.1} parent=1 // pred_check_branch
      %18 = sbr.rel (0) target = $region13
    $region12: #{tpu_custom_call.1} parent=1 // pred_region
      _
    $region13: #{tpu_custom_call.1} parent=1 // pred_fallthru
      _
    // Predicated region
    $region14: #{tpu_custom_call.1} parent=1 // pred_check
      _
    $region15: #{tpu_custom_call.1} parent=1 // pred_check_branch
      %20 = sbr.rel (0) target = $region17
    $region16: #{tpu_custom_call.1} parent=1 // pred_region
      _
    $region17: #{tpu_custom_call.1} parent=1 // pred_fallthru
      _
    // Predicated region
    $region18: #{tpu_custom_call.1} parent=1 // pred_check
      _
    $region19: #{tpu_custom_call.1} parent=1 // pred_check_branch
      %22 = sbr.rel (0) target = $region21
    $region20: #{tpu_custom_call.1} parent=1 // pred_region
      _
    $region21: #{tpu_custom_call.1} parent=1 // pred_fallthru
      _
    // Predicated region
    $region22: #{tpu_custom_call.1} parent=1 // pred_check
      _
    $region23: #{tpu_custom_call.1} parent=1 // pred_check_branch
      %24 = sbr.rel (0) target = $region25
    $region24: #{tpu_custom_call.1} parent=1 // pred_region
      _
    $region25: #{tpu_custom_call.1} parent=1 // pred_fallthru
      _
    // Predicated region
    $region26: #{tpu_custom_call.1} parent=1 // pred_check
      _
    $region27: #{tpu_custom_call.1} parent=1 // pred_check_branch
      %26 = sbr.rel (0) target = $region29
    $region28: #{tpu_custom_call.1} parent=1 // pred_region
      _
    $region29: #{tpu_custom_call.1} parent=1 // pred_fallthru
      _
    %v28 = vld [vmem:[%s0] sm:$0xf]
    %v29 = vld [vmem:[%s0 + $0x4] sm:$0xf]
    %v30 = vld [vmem:[%s0 + $0x8] sm:$0xf]
    %v31 = vld [vmem:[%s0 + $0xc] sm:$0xf]
    %v32 = vld [vmem:[%s0 + $0x10] sm:$0xf]
    %v33 = vld [vmem:[%s0 + $0x14] sm:$0xf]
    %v34 = vld [vmem:[%s0 + $0x18] sm:$0xf]
    %v35 = vld [vmem:[%s0 + $0x1c] sm:$0xf]
    %v36 = vld [vmem:[%s0 + $0x20] sm:$0xf]
    %v37 = vld [vmem:[%s0 + $0x24] sm:$0xf]
    %v38 = vld [vmem:[%s0 + $0x28] sm:$0xf]
    %v39 = vld [vmem:[%s0 + $0x2c] sm:$0xf]
    %v40 = vld [vmem:[%s0 + $0x30] sm:$0xf]
    %v41 = vld [vmem:[%s0 + $0x34] sm:$0xf]
    %v42 = vld [vmem:[%s0 + $0x38] sm:$0xf]
    %v43 = vld [vmem:[%s0 + $0x3c] sm:$0xf]
    %v44 = vld [vmem:[%s0 + $0x40] sm:$0xf]
    %v45 = vld [vmem:[%s0 + $0x44] sm:$0xf]
    %v46 = vld [vmem:[%s0 + $0x48] sm:$0xf]
    %v47 = vld [vmem:[%s0 + $0x4c] sm:$0xf]
    %v48 = vld [vmem:[%s0 + $0x50] sm:$0xf]
    %v49 = vld [vmem:[%s0 + $0x54] sm:$0xf]
    %v50 = vld [vmem:[%s0 + $0x58] sm:$0xf]
    %v51 = vld [vmem:[%s0 + $0x5c] sm:$0xf]
    %v52 = vld [vmem:[%s0 + $0x60] sm:$0xf]
    %v53 = vld [vmem:[%s0 + $0x64] sm:$0xf]
    %v54 = vld [vmem:[%s0 + $0x68] sm:$0xf]
    %v55 = vld [vmem:[%s0 + $0x6c] sm:$0xf]
    %v56 = vld [vmem:[%s0 + $0x70] sm:$0xf]
    %v57 = vld [vmem:[%s0 + $0x74] sm:$0xf]
    %v58 = vld [vmem:[%s0 + $0x78] sm:$0xf]
    %v59 = vld [vmem:[%s0 + $0x7c] sm:$0xf]
    %v60 = vld [vmem:[%s0 + $0x80] sm:$0xf]
    %v61 = vld [vmem:[%s0 + $0x84] sm:$0xf]
    %v62 = vld [vmem:[%s0 + $0x88] sm:$0xf]
    %v63 = vld [vmem:[%s0 + $0x8c] sm:$0xf]
    %v64 = vld [vmem:[%s0 + $0x90] sm:$0xf]
    %v65 = vld [vmem:[%s0 + $0x94] sm:$0xf]
    %v66 = vld [vmem:[%s0 + $0x98] sm:$0xf]
    %v67 = vld [vmem:[%s0 + $0x9c] sm:$0xf]
    %v68 = vld [vmem:[%s0 + $0xa0] sm:$0xf]
    %v69 = vld [vmem:[%s0 + $0xa4] sm:$0x1]
    %v70 = vld [vmem:[%s1] sm:$0xf]
    %v71 = vld [vmem:[%s1 + $0x4] sm:$0xf]
    %v72 = vld [vmem:[%s1 + $0x8] sm:$0xf]
    %v73 = vld [vmem:[%s1 + $0xc] sm:$0xf]
    %v74 = vld [vmem:[%s1 + $0x10] sm:$0xf]
    %v75 = vld [vmem:[%s1 + $0x14] sm:$0xf]
    %v76 = vld [vmem:[%s1 + $0x18] sm:$0xf]
    %v77 = vld [vmem:[%s1 + $0x1c] sm:$0xf]
    %v78 = vld [vmem:[%s2] sm:$0x1]
    %v80 = vperm.slane %v78, 0
    %v124 = vunpack.c.l.b16 %v28
    %v125 = vunpack.c.l.b16 %v29
    %v126 = vunpack.c.l.b16 %v30
    %v127 = vunpack.c.l.b16 %v31
    %v128 = vunpack.c.l.b16 %v32
    %v129 = vunpack.c.l.b16 %v33
    %v130 = vunpack.c.l.b16 %v34
    %v131 = vunpack.c.l.b16 %v35
    %v132 = vunpack.c.l.b16 %v36
    %v133 = vunpack.c.l.b16 %v37
    %v134 = vunpack.c.l.b16 %v38
    %v135 = vunpack.c.l.b16 %v39
    %v136 = vunpack.c.l.b16 %v40
    %v137 = vunpack.c.l.b16 %v41
    %v138 = vunpack.c.l.b16 %v42
    %v139 = vunpack.c.l.b16 %v43
    %v140 = vunpack.c.l.b16 %v44
    %v141 = vunpack.c.l.b16 %v45
    %v142 = vunpack.c.l.b16 %v46
    %v143 = vunpack.c.l.b16 %v47
    %v144 = vunpack.c.l.b16 %v48
    %v145 = vunpack.c.l.b16 %v49
    %v146 = vunpack.c.l.b16 %v50
    %v147 = vunpack.c.l.b16 %v51
    %v148 = vunpack.c.l.b16 %v52
    %v149 = vunpack.c.l.b16 %v53
    %v150 = vunpack.c.l.b16 %v54
    %v151 = vunpack.c.l.b16 %v55
    %v152 = vunpack.c.l.b16 %v56
    %v153 = vunpack.c.l.b16 %v57
    %v154 = vunpack.c.l.b16 %v58
    %v155 = vunpack.c.l.b16 %v59
    %v156 = vunpack.c.l.b16 %v60
    %v157 = vunpack.c.l.b16 %v61
    %v158 = vunpack.c.l.b16 %v62
    %v159 = vunpack.c.l.b16 %v63
    %v160 = vunpack.c.l.b16 %v64
    %v161 = vunpack.c.l.b16 %v65
    %v162 = vunpack.c.l.b16 %v66
    %v163 = vunpack.c.l.b16 %v67
    %v164 = vunpack.c.l.b16 %v68
    %v165 = vunpack.c.l.b16 %v69
    %v166 = vpack.c.b16 %v125, %v124
    %v167 = vpack.c.b16 %v127, %v126
    %v168 = vpack.c.b16 %v129, %v128
    %v169 = vpack.c.b16 %v131, %v130
    %v170 = vpack.c.b16 %v133, %v132
    %v171 = vpack.c.b16 %v135, %v134
    %v172 = vpack.c.b16 %v137, %v136
    %v173 = vpack.c.b16 %v139, %v138
    %v174 = vpack.c.b16 %v141, %v140
    %v175 = vpack.c.b16 %v143, %v142
    %v176 = vpack.c.b16 %v145, %v144
    %v177 = vpack.c.b16 %v147, %v146
    %v178 = vpack.c.b16 %v149, %v148
    %v179 = vpack.c.b16 %v151, %v150
    %v180 = vpack.c.b16 %v153, %v152
    %v181 = vpack.c.b16 %v155, %v154
    %v182 = vpack.c.b16 %v157, %v156
    %v183 = vpack.c.b16 %v159, %v158
    %v184 = vpack.c.b16 %v161, %v160
    %v185 = vpack.c.b16 %v163, %v162
    %v186 = vpack.c.b16 %v165, %v164
    %v195 = vunpack.c.l.b16 %v70
    %v196 = vunpack.c.l.b16 %v71
    %v197 = vunpack.c.l.b16 %v72
    %v198 = vunpack.c.l.b16 %v73
    %v199 = vunpack.c.l.b16 %v74
    %v200 = vunpack.c.l.b16 %v75
    %v201 = vunpack.c.l.b16 %v76
    %v202 = vunpack.c.l.b16 %v77
    %v203 = vpack.c.b16 %v196, %v195
    %v204 = vpack.c.b16 %v198, %v197
    %v205 = vpack.c.b16 %v200, %v199
    %v206 = vpack.c.b16 %v202, %v201
    %vm211 = vcmask 523264
    %v213 = vsel %vm211, %v166, 0
    %v216 = vsel %vm211, %v167, 0
    %v219 = vsel %vm211, %v168, 0
    %v222 = vsel %vm211, %v169, 0
    %v225 = vsel %vm211, %v170, 0
    %v228 = vsel %vm211, %v171, 0
    %v231 = vsel %vm211, %v172, 0
    %v234 = vsel %vm211, %v173, 0
    %v237 = vsel %vm211, %v174, 0
    %v240 = vsel %vm211, %v175, 0
    %v243 = vsel %vm211, %v176, 0
    %v246 = vsel %vm211, %v177, 0
    %v249 = vsel %vm211, %v178, 0
    %v252 = vsel %vm211, %v179, 0
    %v255 = vsel %vm211, %v180, 0
    %v258 = vsel %vm211, %v181, 0
    %v261 = vsel %vm211, %v182, 0
    %v264 = vsel %vm211, %v183, 0
    %v267 = vsel %vm211, %v184, 0
    %v270 = vsel %vm211, %v185, 0
    %v273 = vsel %vm211, %v186, 0
    %275 = vmatpush.bf16.msra.mxu0 0
    %276 = vmatpush.bf16.msra.mxu0 0
    %277 = vmatpush.bf16.msra.mxu0 0
    %278 = vmatpush.bf16.msra.mxu0 0
    %279 = vmatpush.bf16.msra.mxu0 %v206
    %280 = vmatpush.bf16.msra.mxu0 %v205
    %281 = vmatpush.bf16.msra.mxu0 %v204
    %282 = vmatpush.bf16.msra.mxu0 %v203
    %283 = vmatmul.bf16.gmra.mxu0 %v213
    %v284 = vpop.f32.mrf.mxu0
    %v285 = vadd.f32 %v80, %v284
    %v286 = vpop.f32.mrf.mxu0
    %v287 = vadd.f32 %v80, %v286
    %288 = vmatmul.bf16.gmra.mxu0 %v216
    %v289 = vpop.f32.mrf.mxu0
    %v290 = vadd.f32 %v80, %v289
    %v291 = vpop.f32.mrf.mxu0
    %v292 = vadd.f32 %v80, %v291
    %293 = vmatmul.bf16.gmra.mxu0 %v219
    %v294 = vpop.f32.mrf.mxu0
    %v295 = vadd.f32 %v80, %v294
    %v296 = vpop.f32.mrf.mxu0
    %v297 = vadd.f32 %v80, %v296
    %298 = vmatmul.bf16.gmra.mxu0 %v222
    %v299 = vpop.f32.mrf.mxu0
    %v300 = vadd.f32 %v80, %v299
    %v301 = vpop.f32.mrf.mxu0
    %v302 = vadd.f32 %v80, %v301
    %303 = vmatmul.bf16.gmra.mxu0 %v225
    %v304 = vpop.f32.mrf.mxu0
    %v305 = vadd.f32 %v80, %v304
    %v306 = vpop.f32.mrf.mxu0
    %v307 = vadd.f32 %v80, %v306
    %308 = vmatmul.bf16.gmra.mxu0 %v228
    %v309 = vpop.f32.mrf.mxu0
    %v310 = vadd.f32 %v80, %v309
    %v311 = vpop.f32.mrf.mxu0
    %v312 = vadd.f32 %v80, %v311
    %313 = vmatmul.bf16.gmra.mxu0 %v231
    %v314 = vpop.f32.mrf.mxu0
    %v315 = vadd.f32 %v80, %v314
    %v316 = vpop.f32.mrf.mxu0
    %v317 = vadd.f32 %v80, %v316
    %318 = vmatmul.bf16.gmra.mxu0 %v234
    %v319 = vpop.f32.mrf.mxu0
    %v320 = vadd.f32 %v80, %v319
    %v321 = vpop.f32.mrf.mxu0
    %v322 = vadd.f32 %v80, %v321
    %323 = vmatmul.bf16.gmra.mxu0 %v237
    %v324 = vpop.f32.mrf.mxu0
    %v325 = vadd.f32 %v80, %v324
    %v326 = vpop.f32.mrf.mxu0
    %v327 = vadd.f32 %v80, %v326
    %328 = vmatmul.bf16.gmra.mxu0 %v240
    %v329 = vpop.f32.mrf.mxu0
    %v330 = vadd.f32 %v80, %v329
    %v331 = vpop.f32.mrf.mxu0
    %v332 = vadd.f32 %v80, %v331
    %333 = vmatmul.bf16.gmra.mxu0 %v243
    %v334 = vpop.f32.mrf.mxu0
    %v335 = vadd.f32 %v80, %v334
    %v336 = vpop.f32.mrf.mxu0
    %v337 = vadd.f32 %v80, %v336
    %338 = vmatmul.bf16.gmra.mxu0 %v246
    %v339 = vpop.f32.mrf.mxu0
    %v340 = vadd.f32 %v80, %v339
    %v341 = vpop.f32.mrf.mxu0
    %v342 = vadd.f32 %v80, %v341
    %343 = vmatmul.bf16.gmra.mxu0 %v249
    %v344 = vpop.f32.mrf.mxu0
    %v345 = vadd.f32 %v80, %v344
    %v346 = vpop.f32.mrf.mxu0
    %v347 = vadd.f32 %v80, %v346
    %348 = vmatmul.bf16.gmra.mxu0 %v252
    %v349 = vpop.f32.mrf.mxu0
    %v350 = vadd.f32 %v80, %v349
    %v351 = vpop.f32.mrf.mxu0
    %v352 = vadd.f32 %v80, %v351
    %353 = vmatmul.bf16.gmra.mxu0 %v255
    %v354 = vpop.f32.mrf.mxu0
    %v355 = vadd.f32 %v80, %v354
    %v356 = vpop.f32.mrf.mxu0
    %v357 = vadd.f32 %v80, %v356
    %358 = vmatmul.bf16.gmra.mxu0 %v258
    %v359 = vpop.f32.mrf.mxu0
    %v360 = vadd.f32 %v80, %v359
    %v361 = vpop.f32.mrf.mxu0
    %v362 = vadd.f32 %v80, %v361
    %363 = vmatmul.bf16.gmra.mxu0 %v261
    %v364 = vpop.f32.mrf.mxu0
    %v365 = vadd.f32 %v80, %v364
    %v366 = vpop.f32.mrf.mxu0
    %v367 = vadd.f32 %v80, %v366
    %368 = vmatmul.bf16.gmra.mxu0 %v264
    %v369 = vpop.f32.mrf.mxu0
    %v370 = vadd.f32 %v80, %v369
    %v371 = vpop.f32.mrf.mxu0
    %v372 = vadd.f32 %v80, %v371
    %373 = vmatmul.bf16.gmra.mxu0 %v267
    %v374 = vpop.f32.mrf.mxu0
    %v375 = vadd.f32 %v80, %v374
    %v376 = vpop.f32.mrf.mxu0
    %v377 = vadd.f32 %v80, %v376
    %378 = vmatmul.bf16.gmra.mxu0 %v270
    %v379 = vpop.f32.mrf.mxu0
    %v380 = vadd.f32 %v80, %v379
    %v381 = vpop.f32.mrf.mxu0
    %v382 = vadd.f32 %v80, %v381
    %383 = vmatmul.bf16.gmra.mxu0 %v273
    %v384 = vpop.f32.mrf.mxu0
    %v385 = vadd.f32 %v80, %v384
    %v386 = vpop.f32.mrf.mxu0
    %v387 = vadd.f32 %v80, %v386
    %388 = vdwg.mxu0
    %v389 = vmax.f32 %v285, 0.0
    %v390 = vmax.f32 %v287, 0.0
    %v391 = vmax.f32 %v290, 0.0
    %v392 = vmax.f32 %v292, 0.0
    %v393 = vmax.f32 %v295, 0.0
    %v394 = vmax.f32 %v297, 0.0
    %v395 = vmax.f32 %v300, 0.0
    %v396 = vmax.f32 %v302, 0.0
    %v397 = vmax.f32 %v305, 0.0
    %v398 = vmax.f32 %v307, 0.0
    %v399 = vmax.f32 %v310, 0.0
    %v400 = vmax.f32 %v312, 0.0
    %v401 = vmax.f32 %v315, 0.0
    %v402 = vmax.f32 %v317, 0.0
    %v403 = vmax.f32 %v320, 0.0
    %v404 = vmax.f32 %v322, 0.0
    %v405 = vmax.f32 %v325, 0.0
    %v406 = vmax.f32 %v327, 0.0
    %v407 = vmax.f32 %v330, 0.0
    %v408 = vmax.f32 %v332, 0.0
    %v409 = vmax.f32 %v335, 0.0
    %v410 = vmax.f32 %v337, 0.0
    %v411 = vmax.f32 %v340, 0.0
    %v412 = vmax.f32 %v342, 0.0
    %v413 = vmax.f32 %v345, 0.0
    %v414 = vmax.f32 %v347, 0.0
    %v415 = vmax.f32 %v350, 0.0
    %v416 = vmax.f32 %v352, 0.0
    %v417 = vmax.f32 %v355, 0.0
    %v418 = vmax.f32 %v357, 0.0
    %v419 = vmax.f32 %v360, 0.0
    %v420 = vmax.f32 %v362, 0.0
    %v421 = vmax.f32 %v365, 0.0
    %v422 = vmax.f32 %v367, 0.0
    %v423 = vmax.f32 %v370, 0.0
    %v424 = vmax.f32 %v372, 0.0
    %v425 = vmax.f32 %v375, 0.0
    %v426 = vmax.f32 %v377, 0.0
    %v427 = vmax.f32 %v380, 0.0
    %v428 = vmax.f32 %v382, 0.0
    %v429 = vmax.f32 %v385, 0.0
    %v430 = vmax.f32 %v387, 0.0
    %v431 = vpack.c.bf16 %v390, %v389
    %v432 = vpack.c.bf16 %v392, %v391
    %v433 = vpack.c.bf16 %v394, %v393
    %v434 = vpack.c.bf16 %v396, %v395
    %v435 = vpack.c.bf16 %v398, %v397
    %v436 = vpack.c.bf16 %v400, %v399
    %v437 = vpack.c.bf16 %v402, %v401
    %v438 = vpack.c.bf16 %v404, %v403
    %v439 = vpack.c.bf16 %v406, %v405
    %v440 = vpack.c.bf16 %v408, %v407
    %v441 = vpack.c.bf16 %v410, %v409
    %v442 = vpack.c.bf16 %v412, %v411
    %v443 = vpack.c.bf16 %v414, %v413
    %v444 = vpack.c.bf16 %v416, %v415
    %v445 = vpack.c.bf16 %v418, %v417
    %v446 = vpack.c.bf16 %v420, %v419
    %v447 = vpack.c.bf16 %v422, %v421
    %v448 = vpack.c.bf16 %v424, %v423
    %v449 = vpack.c.bf16 %v426, %v425
    %v450 = vpack.c.bf16 %v428, %v427
    %v451 = vpack.c.bf16 %v430, %v429
    %v452 = vld [vmem:[%s3] sm:$0xf]
    %v453 = vld [vmem:[%s3 + $0x4] sm:$0xf]
    %v454 = vld [vmem:[%s3 + $0x8] sm:$0xf]
    %v455 = vld [vmem:[%s3 + $0xc] sm:$0xf]
    %v456 = vld [vmem:[%s3 + $0x10] sm:$0xf]
    %v457 = vld [vmem:[%s3 + $0x14] sm:$0xf]
    %v458 = vld [vmem:[%s3 + $0x18] sm:$0xf]
    %v459 = vld [vmem:[%s3 + $0x1c] sm:$0xf]
    %v460 = vld [vmem:[%s4] sm:$0x1]
    %v462 = vperm.slane %v460, 0
    %v472 = vunpack.c.l.b16 %v452
    %v473 = vunpack.c.l.b16 %v453
    %v474 = vunpack.c.l.b16 %v454
    %v475 = vunpack.c.l.b16 %v455
    %v476 = vunpack.c.l.b16 %v456
    %v477 = vunpack.c.l.b16 %v457
    %v478 = vunpack.c.l.b16 %v458
    %v479 = vunpack.c.l.b16 %v459
    %v480 = vpack.c.b16 %v473, %v472
    %v481 = vpack.c.b16 %v475, %v474
    %v482 = vpack.c.b16 %v477, %v476
    %v483 = vpack.c.b16 %v479, %v478
    %v489 = vsel %vm211, %v431, 0
    %v492 = vsel %vm211, %v432, 0
    %v495 = vsel %vm211, %v433, 0
    %v498 = vsel %vm211, %v434, 0
    %v501 = vsel %vm211, %v435, 0
    %v504 = vsel %vm211, %v436, 0
    %v507 = vsel %vm211, %v437, 0
    %v510 = vsel %vm211, %v438, 0
    %v513 = vsel %vm211, %v439, 0
    %v516 = vsel %vm211, %v440, 0
    %v519 = vsel %vm211, %v441, 0
    %v522 = vsel %vm211, %v442, 0
    %v525 = vsel %vm211, %v443, 0
    %v528 = vsel %vm211, %v444, 0
    %v531 = vsel %vm211, %v445, 0
    %v534 = vsel %vm211, %v446, 0
    %v537 = vsel %vm211, %v447, 0
    %v540 = vsel %vm211, %v448, 0
    %v543 = vsel %vm211, %v449, 0
    %v546 = vsel %vm211, %v450, 0
    %v549 = vsel %vm211, %v451, 0
    %551 = vmatpush.bf16.msra.mxu0 0
    %552 = vmatpush.bf16.msra.mxu0 0
    %553 = vmatpush.bf16.msra.mxu0 0
    %554 = vmatpush.bf16.msra.mxu0 0
    %555 = vmatpush.bf16.msra.mxu0 %v483
    %556 = vmatpush.bf16.msra.mxu0 %v482
    %557 = vmatpush.bf16.msra.mxu0 %v481
    %558 = vmatpush.bf16.msra.mxu0 %v480
    %559 = vmatmul.bf16.gmra.mxu0 %v489
    %v560 = vpop.f32.mrf.mxu0
    %v561 = vadd.f32 %v462, %v560
    %v562 = vpop.f32.mrf.mxu0
    %v563 = vadd.f32 %v462, %v562
    %564 = vmatmul.bf16.gmra.mxu0 %v492
    %v565 = vpop.f32.mrf.mxu0
    %v566 = vadd.f32 %v462, %v565
    %v567 = vpop.f32.mrf.mxu0
    %v568 = vadd.f32 %v462, %v567
    %569 = vmatmul.bf16.gmra.mxu0 %v495
    %v570 = vpop.f32.mrf.mxu0
    %v571 = vadd.f32 %v462, %v570
    %v572 = vpop.f32.mrf.mxu0
    %v573 = vadd.f32 %v462, %v572
    %574 = vmatmul.bf16.gmra.mxu0 %v498
    %v575 = vpop.f32.mrf.mxu0
    %v576 = vadd.f32 %v462, %v575
    %v577 = vpop.f32.mrf.mxu0
    %v578 = vadd.f32 %v462, %v577
    %579 = vmatmul.bf16.gmra.mxu0 %v501
    %v580 = vpop.f32.mrf.mxu0
    %v581 = vadd.f32 %v462, %v580
    %v582 = vpop.f32.mrf.mxu0
    %v583 = vadd.f32 %v462, %v582
    %584 = vmatmul.bf16.gmra.mxu0 %v504
    %v585 = vpop.f32.mrf.mxu0
    %v586 = vadd.f32 %v462, %v585
    %v587 = vpop.f32.mrf.mxu0
    %v588 = vadd.f32 %v462, %v587
    %589 = vmatmul.bf16.gmra.mxu0 %v507
    %v590 = vpop.f32.mrf.mxu0
    %v591 = vadd.f32 %v462, %v590
    %v592 = vpop.f32.mrf.mxu0
    %v593 = vadd.f32 %v462, %v592
    %594 = vmatmul.bf16.gmra.mxu0 %v510
    %v595 = vpop.f32.mrf.mxu0
    %v596 = vadd.f32 %v462, %v595
    %v597 = vpop.f32.mrf.mxu0
    %v598 = vadd.f32 %v462, %v597
    %599 = vmatmul.bf16.gmra.mxu0 %v513
    %v600 = vpop.f32.mrf.mxu0
    %v601 = vadd.f32 %v462, %v600
    %v602 = vpop.f32.mrf.mxu0
    %v603 = vadd.f32 %v462, %v602
    %604 = vmatmul.bf16.gmra.mxu0 %v516
    %v605 = vpop.f32.mrf.mxu0
    %v606 = vadd.f32 %v462, %v605
    %v607 = vpop.f32.mrf.mxu0
    %v608 = vadd.f32 %v462, %v607
    %609 = vmatmul.bf16.gmra.mxu0 %v519
    %v610 = vpop.f32.mrf.mxu0
    %v611 = vadd.f32 %v462, %v610
    %v612 = vpop.f32.mrf.mxu0
    %v613 = vadd.f32 %v462, %v612
    %614 = vmatmul.bf16.gmra.mxu0 %v522
    %v615 = vpop.f32.mrf.mxu0
    %v616 = vadd.f32 %v462, %v615
    %v617 = vpop.f32.mrf.mxu0
    %v618 = vadd.f32 %v462, %v617
    %619 = vmatmul.bf16.gmra.mxu0 %v525
    %v620 = vpop.f32.mrf.mxu0
    %v621 = vadd.f32 %v462, %v620
    %v622 = vpop.f32.mrf.mxu0
    %v623 = vadd.f32 %v462, %v622
    %624 = vmatmul.bf16.gmra.mxu0 %v528
    %v625 = vpop.f32.mrf.mxu0
    %v626 = vadd.f32 %v462, %v625
    %v627 = vpop.f32.mrf.mxu0
    %v628 = vadd.f32 %v462, %v627
    %629 = vmatmul.bf16.gmra.mxu0 %v531
    %v630 = vpop.f32.mrf.mxu0
    %v631 = vadd.f32 %v462, %v630
    %v632 = vpop.f32.mrf.mxu0
    %v633 = vadd.f32 %v462, %v632
    %634 = vmatmul.bf16.gmra.mxu0 %v534
    %v635 = vpop.f32.mrf.mxu0
    %v636 = vadd.f32 %v462, %v635
    %v637 = vpop.f32.mrf.mxu0
    %v638 = vadd.f32 %v462, %v637
    %639 = vmatmul.bf16.gmra.mxu0 %v537
    %v640 = vpop.f32.mrf.mxu0
    %v641 = vadd.f32 %v462, %v640
    %v642 = vpop.f32.mrf.mxu0
    %v643 = vadd.f32 %v462, %v642
    %644 = vmatmul.bf16.gmra.mxu0 %v540
    %v645 = vpop.f32.mrf.mxu0
    %v646 = vadd.f32 %v462, %v645
    %v647 = vpop.f32.mrf.mxu0
    %v648 = vadd.f32 %v462, %v647
    %649 = vmatmul.bf16.gmra.mxu0 %v543
    %v650 = vpop.f32.mrf.mxu0
    %v651 = vadd.f32 %v462, %v650
    %v652 = vpop.f32.mrf.mxu0
    %v653 = vadd.f32 %v462, %v652
    %654 = vmatmul.bf16.gmra.mxu0 %v546
    %v655 = vpop.f32.mrf.mxu0
    %v656 = vadd.f32 %v462, %v655
    %v657 = vpop.f32.mrf.mxu0
    %v658 = vadd.f32 %v462, %v657
    %659 = vmatmul.bf16.gmra.mxu0 %v549
    %v660 = vpop.f32.mrf.mxu0
    %v661 = vadd.f32 %v462, %v660
    %v662 = vpop.f32.mrf.mxu0
    %v663 = vadd.f32 %v462, %v662
    %664 = vdwg.mxu0
    %v665 = vmax.f32 %v561, 0.0
    %v666 = vmax.f32 %v563, 0.0
    %v667 = vmax.f32 %v566, 0.0
    %v668 = vmax.f32 %v568, 0.0
    %v669 = vmax.f32 %v571, 0.0
    %v670 = vmax.f32 %v573, 0.0
    %v671 = vmax.f32 %v576, 0.0
    %v672 = vmax.f32 %v578, 0.0
    %v673 = vmax.f32 %v581, 0.0
    %v674 = vmax.f32 %v583, 0.0
    %v675 = vmax.f32 %v586, 0.0
    %v676 = vmax.f32 %v588, 0.0
    %v677 = vmax.f32 %v591, 0.0
    %v678 = vmax.f32 %v593, 0.0
    %v679 = vmax.f32 %v596, 0.0
    %v680 = vmax.f32 %v598, 0.0
    %v681 = vmax.f32 %v601, 0.0
    %v682 = vmax.f32 %v603, 0.0
    %v683 = vmax.f32 %v606, 0.0
    %v684 = vmax.f32 %v608, 0.0
    %v685 = vmax.f32 %v611, 0.0
    %v686 = vmax.f32 %v613, 0.0
    %v687 = vmax.f32 %v616, 0.0
    %v688 = vmax.f32 %v618, 0.0
    %v689 = vmax.f32 %v621, 0.0
    %v690 = vmax.f32 %v623, 0.0
    %v691 = vmax.f32 %v626, 0.0
    %v692 = vmax.f32 %v628, 0.0
    %v693 = vmax.f32 %v631, 0.0
    %v694 = vmax.f32 %v633, 0.0
    %v695 = vmax.f32 %v636, 0.0
    %v696 = vmax.f32 %v638, 0.0
    %v697 = vmax.f32 %v641, 0.0
    %v698 = vmax.f32 %v643, 0.0
    %v699 = vmax.f32 %v646, 0.0
    %v700 = vmax.f32 %v648, 0.0
    %v701 = vmax.f32 %v651, 0.0
    %v702 = vmax.f32 %v653, 0.0
    %v703 = vmax.f32 %v656, 0.0
    %v704 = vmax.f32 %v658, 0.0
    %v705 = vmax.f32 %v661, 0.0
    %v706 = vmax.f32 %v663, 0.0
    %v707 = vld [vmem:[%s5] sm:$0xf]
    %v708 = vpack.c.bf16 %v666, %v665
    %v709 = vpack.c.bf16 %v668, %v667
    %v710 = vpack.c.bf16 %v670, %v669
    %v711 = vpack.c.bf16 %v672, %v671
    %v712 = vpack.c.bf16 %v674, %v673
    %v713 = vpack.c.bf16 %v676, %v675
    %v714 = vpack.c.bf16 %v678, %v677
    %v715 = vpack.c.bf16 %v680, %v679
    %v716 = vpack.c.bf16 %v682, %v681
    %v717 = vpack.c.bf16 %v684, %v683
    %v718 = vpack.c.bf16 %v686, %v685
    %v719 = vpack.c.bf16 %v688, %v687
    %v720 = vpack.c.bf16 %v690, %v689
    %v721 = vpack.c.bf16 %v692, %v691
    %v722 = vpack.c.bf16 %v694, %v693
    %v723 = vpack.c.bf16 %v696, %v695
    %v724 = vpack.c.bf16 %v698, %v697
    %v725 = vpack.c.bf16 %v700, %v699
    %v726 = vpack.c.bf16 %v702, %v701
    %v727 = vpack.c.bf16 %v704, %v703
    %v728 = vpack.c.bf16 %v706, %v705
    %v729 = vld [vmem:[%s6] sm:$0xff]
    %731 = vset.pattern.permute.xlu0 0
    %732 = vperm.xlu0 %731, %v729
    %v733 = vpop.permute.xlu0 %732
    %v736 = vsel %vm211, %v707, 0
    %v739 = vsel %vm211, %v708, 0
    %v742 = vsel %vm211, %v709, 0
    %v745 = vsel %vm211, %v710, 0
    %v748 = vsel %vm211, %v711, 0
    %v751 = vsel %vm211, %v712, 0
    %v754 = vsel %vm211, %v713, 0
    %v757 = vsel %vm211, %v714, 0
    %v760 = vsel %vm211, %v715, 0
    %v763 = vsel %vm211, %v716, 0
    %v766 = vsel %vm211, %v717, 0
    %v769 = vsel %vm211, %v718, 0
    %v772 = vsel %vm211, %v719, 0
    %v775 = vsel %vm211, %v720, 0
    %v778 = vsel %vm211, %v721, 0
    %v781 = vsel %vm211, %v722, 0
    %v784 = vsel %vm211, %v723, 0
    %v787 = vsel %vm211, %v724, 0
    %v790 = vsel %vm211, %v725, 0
    %v793 = vsel %vm211, %v726, 0
    %v796 = vsel %vm211, %v727, 0
    %v799 = vsel %vm211, %v728, 0
    %801 = vmatpush.bf16.xpose.msra.mxu0 %v760
    %802 = vmatpush.bf16.xpose.msra.mxu0 %v757
    %803 = vmatpush.bf16.xpose.msra.mxu0 %v754
    %804 = vmatpush.bf16.xpose.msra.mxu0 %v751
    %805 = vmatpush.bf16.xpose.msra.mxu0 %v748
    %806 = vmatpush.bf16.xpose.msra.mxu0 %v745
    %807 = vmatpush.bf16.xpose.msra.mxu0 %v742
    %808 = vmatpush.bf16.xpose.msra.mxu0 %v739
    %809 = vmatmul.bf16.gmra.mxu0 %v736
    %v810 = vpop.f32.mrf.mxu0
    %v811 = vadd.f32 %v733, %v810
    %v812 = vpop.f32.mrf.mxu0
    %813 = vdwg.mxu0
    %814 = vmatpush.bf16.xpose.msra.mxu0 %v784
    %815 = vmatpush.bf16.xpose.msra.mxu0 %v781
    %816 = vmatpush.bf16.xpose.msra.mxu0 %v778
    %817 = vmatpush.bf16.xpose.msra.mxu0 %v775
    %818 = vmatpush.bf16.xpose.msra.mxu0 %v772
    %819 = vmatpush.bf16.xpose.msra.mxu0 %v769
    %820 = vmatpush.bf16.xpose.msra.mxu0 %v766
    %821 = vmatpush.bf16.xpose.msra.mxu0 %v763
    %822 = vmatmul.bf16.gmra.mxu0 %v736
    %v823 = vpop.f32.mrf.mxu0
    %v824 = vadd.f32 %v733, %v823
    %v825 = vpop.f32.mrf.mxu0
    %826 = vdwg.mxu0
    %827 = vmatpush.bf16.xpose.msra.mxu0 0
    %828 = vmatpush.bf16.xpose.msra.mxu0 0
    %829 = vmatpush.bf16.xpose.msra.mxu0 0
    %830 = vmatpush.bf16.xpose.msra.mxu0 %v799
    %831 = vmatpush.bf16.xpose.msra.mxu0 %v796
    %832 = vmatpush.bf16.xpose.msra.mxu0 %v793
    %833 = vmatpush.bf16.xpose.msra.mxu0 %v790
    %834 = vmatpush.bf16.xpose.msra.mxu0 %v787
    %835 = vmatmul.bf16.gmra.mxu0 %v736
    %v836 = vpop.f32.mrf.mxu0
    %v837 = vadd.f32 %v733, %v836
    %v838 = vpop.f32.mrf.mxu0
    %839 = vdwg.mxu0
    %v840 = vlaneseq
    %v841 = vshrl.u32 %v840, 7
    %v842 = vmax.f32 %v811, 0.0
    %v843 = vmax.f32 %v824, 0.0
    %v844 = vmax.f32 %v837, 0.0
    %vm845 = vcmp.ne.f32.partialorder %v811, %v811
    %vm846 = vcmp.ne.f32.partialorder %v824, %v824
    %vm847 = vcmp.ne.f32.partialorder %v837, %v837
    %v848 = vadd.f32 %v811, 0.0
    %v849 = vadd.f32 %v824, 0.0
    %v850 = vadd.f32 %v837, 0.0
    %v851 = vand.u32 2147483647, %v811
    %v852 = vand.u32 2147483647, %v824
    %v853 = vand.u32 2147483647, %v837
    %v854 = vsub.f32 0.0, %v851
    %v855 = vsub.f32 0.0, %v852
    %v856 = vsub.f32 0.0, %v853
    %v857 = vmul.f32 %v854, 1.442695
    %v858 = vpow.pop %v857
    %v859 = vmul.f32 %v855, 1.442695
    %v860 = vpow.pop %v859
    %v861 = vmul.f32 %v856, 1.442695
    %v862 = vpow.pop %v861
    %v863 = vadd.f32 %v858, 1.0
    %v864 = vlog2.pop %v863
    %v865 = vmul.f32 %v864, 0.6931472
    %v866 = vmul.f32 -0.5, %v858
    %v867 = vadd.f32 %v866, 1.0
    %v868 = vmul.f32 %v867, %v858
    %v869 = vand.u32 2147483647, %v858
    %vm870 = vcmp.lt.f32.partialorder %v869, 0.0004427343
    %v871 = vsel %vm870, %v868, %v865
    %v872 = vadd.f32 %v860, 1.0
    %v873 = vlog2.pop %v872
    %v874 = vmul.f32 %v873, 0.6931472
    %v875 = vmul.f32 -0.5, %v860
    %v876 = vadd.f32 %v875, 1.0
    %v877 = vmul.f32 %v876, %v860
    %v878 = vand.u32 2147483647, %v860
    %vm879 = vcmp.lt.f32.partialorder %v878, 0.0004427343
    %v880 = vsel %vm879, %v877, %v874
    %v881 = vadd.f32 %v862, 1.0
    %v882 = vlog2.pop %v881
    %v883 = vmul.f32 %v882, 0.6931472
    %v884 = vmul.f32 -0.5, %v862
    %v885 = vadd.f32 %v884, 1.0
    %v886 = vmul.f32 %v885, %v862
    %v887 = vand.u32 2147483647, %v862
    %vm888 = vcmp.lt.f32.partialorder %v887, 0.0004427343
    %v889 = vsel %vm888, %v886, %v883
    %v890 = vadd.f32 %v842, %v871
    %v891 = vadd.f32 %v843, %v880
    %v892 = vadd.f32 %v844, %v889
    %v893 = vsel %vm845, %v848, %v890
    %v894 = vsel %vm846, %v849, %v891
    %v895 = vsel %vm847, %v850, %v892
    %v896 = vadd.f32 %v893, 0.01
    %v897 = vadd.f32 %v894, 0.01
    %v898 = vadd.f32 %v895, 0.01
    %v899 = vtanh.pop %v811
    %v900 = vtanh.pop %v824
    %v901 = vtanh.pop %v837
    %v902 = vmul.f32 %v899, 0.9
    %v903 = vmul.f32 %v900, 0.9
    %v904 = vmul.f32 %v901, 0.9
    %vm905 = vcmp.lt.s32.totalorder %v841, 2
    %vm906 = vcmp.lt.s32.totalorder %v841, 4
    %vm907 = vcmp.eq.s32.totalorder %v841, 4
    %v908 = vsel %vm907, %v902, %v811
    %v909 = vsel %vm907, %v903, %v824
    %v910 = vsel %vm907, %v904, %v837
    %v911 = vsel %vm906, %v896, %v908
    %v912 = vsel %vm906, %v897, %v909
    %v913 = vsel %vm906, %v898, %v910
    %v914 = vsel %vm905, %v811, %v911
    %v915 = vsel %vm905, %v824, %v912
    %v916 = vsel %vm905, %v837, %v913
    %917 = vst [vmem:[#allocation2] sm:$0xff] %v914
    %918 = vst [vmem:[#allocation2 + $0x8] sm:$0xff] %v915
    %vm919 = vcmask 605184
    %920 = vst.msk [vmem:[#allocation2 + $0x10] sm:$0xff] %vm919, %v916
    // Predicated region
    $region30: #{tpu_custom_call.1} parent=1 // pred_check
      _
    $region31: #{tpu_custom_call.1} parent=1 // pred_check_branch
      %922 = sbr.rel (0) target = $region33
    $region32: #{tpu_custom_call.1} parent=1 // pred_region
      %924 = vsyncadd [#allocation3], 0
      %s926 = sshll.u32 [#allocation2], 4
      %s927 = int_to_ptr.vmem [resolvable:$true] %s926
      %s928 = sshll.u32 %s7, 4
      %s929 = int_to_ptr.hbm [resolvable:$true] %s928
      %931 = dma.vmem_to_hbm [thread:$0]  %s927, 384, %s929, [#allocation3]
    $region33: #{tpu_custom_call.1} parent=1 // pred_fallthru
      _
    // Predicated region
    $region34: #{tpu_custom_call.1} parent=1 // pred_check
      _
    $region35: #{tpu_custom_call.1} parent=1 // pred_check_branch
      %933 = sbr.rel (0) target = $region37
    $region36: #{tpu_custom_call.1} parent=1 // pred_region
      %935 = dma.done [#allocation3], 384
    $region37: #{tpu_custom_call.1} parent=1 // pred_fallthru
      _
    %936 = vsyncpa [#allocation3], 1

</llo_original>
